<compile_context>
chip_gen: v7x
topology: tpu7x:2x2x1
jax: 0.10.0
libtpu: 0.0.40
codegen_flags: <defaults>
</compile_context>

<pallas_src>
import functools

import jax
import jax.numpy as jnp
from jax import lax
from jax.experimental import pallas as pl
from jax.experimental.pallas import tpu as pltpu


_VMEM_LIMIT_BYTES = 32 * 1024 * 1024  # fits v5e/v6e (128 MiB) and v7x (64 MiB) parts


# ------------------------------ tiling helpers ------------------------------ #
def _pick_row_tile(rows, d, bytes_per_buffer=2 << 20, max_tile=1024):
    """Largest row tile keeping one f32 [tile, d] buffer under bytes_per_buffer."""
    cap = max(8, (bytes_per_buffer // (d * 4)) // 8 * 8)
    tile = min(max_tile, cap)
    if rows <= tile:
        return max(8, ((rows + 7) // 8) * 8)  # single grid step, round up to sublane
    return tile


def _pad_rows(x2d, row_tile):
    rows = x2d.shape[0]
    pad = (-rows) % row_tile
    if pad:
        x2d = jnp.pad(x2d, ((0, pad), (0, 0)))
    return x2d


# ----------------------------- RMSNorm kernel ------------------------------ #
def _rmsnorm_kernel(x_ref, w_ref, o_ref, *, eps):
    x = x_ref[...].astype(jnp.float32)                     # [TR, D]
    ms = jnp.mean(x * x, axis=-1, keepdims=True)           # [TR, 1]
    inv = lax.rsqrt(ms + eps)                              # EUP rsqrt, no divide
    o_ref[...] = (x * inv * w_ref[...].astype(jnp.float32)).astype(o_ref.dtype)


def rmsnorm(x2d, weight, *, eps, row_tile=None):
    rows, d = x2d.shape
    if row_tile is None:
        row_tile = _pick_row_tile(rows, d)
    xp = _pad_rows(x2d, row_tile)
    rows_p = xp.shape[0]
    w2d = weight.reshape(1, d)
    out = pl.pallas_call(
        functools.partial(_rmsnorm_kernel, eps=eps),
        out_shape=jax.ShapeDtypeStruct((rows_p, d), x2d.dtype),
        grid_spec=pltpu.PrefetchScalarGridSpec(
            num_scalar_prefetch=0,
            grid=(rows_p // row_tile,),
            in_specs=[
                pl.BlockSpec((row_tile, d), lambda i: (i, 0)),
                pl.BlockSpec((1, d), lambda i: (0, 0)),
            ],
            out_specs=pl.BlockSpec((row_tile, d), lambda i: (i, 0)),
        ),
        compiler_params=pltpu.CompilerParams(
            dimension_semantics=("parallel",),       # independent row tiles -> 2 TCs on v7x
            vmem_limit_bytes=_VMEM_LIMIT_BYTES),
    )(xp, w2d)
    return out[:rows] if rows_p != rows else out


# ------------------- residual-add + (inverted) dropout kernel -------------- #
def _resadd_dropout_kernel(seed_ref, x_ref, y_ref, o_ref, *, rate, row_tile):
    x = x_ref[...].astype(jnp.float32)
    y = y_ref[...].astype(jnp.float32)
    if rate > 0.0:
        keep_prob = 1.0 - rate
        inv_keep = jnp.float32(1.0 / keep_prob)
        # keep iff hash(u32) < thresh; P(keep) = thresh / 2**32  (bias <= 2**-32)
        thresh = jnp.uint32(min(int(keep_prob * 4294967296.0), 4294967295))
        tr, d = x.shape
        row = lax.broadcasted_iota(jnp.uint32, (tr, d), 0)
        col = lax.broadcasted_iota(jnp.uint32, (tr, d), 1)
        base = (pl.program_id(0) * row_tile).astype(jnp.uint32)   # global row offset
        # Counter-based hash (murmur3-style fmix) on the VPU: portable, no pltpu.prng_*.
        h = (row + base) * jnp.uint32(0x9E3779B1) + col * jnp.uint32(0x85EBCA77)
        h = h ^ seed_ref[0].astype(jnp.uint32)
        h = h ^ (h >> 16)
        h = h * jnp.uint32(0x85EBCA6B)
        h = h ^ (h >> 13)
        h = h * jnp.uint32(0xC2B2AE35)
        h = h ^ (h >> 16)
        y = jnp.where(h < thresh, y * inv_keep, jnp.float32(0.0))  # one select + one mul
    o_ref[...] = (x + y).astype(o_ref.dtype)


def residual_dropout_add(x2d, y2d, seed, *, rate, row_tile=None):
    rows, d = x2d.shape
    if row_tile is None:
        row_tile = _pick_row_tile(rows, d)
    xp = _pad_rows(x2d, row_tile)
    yp = _pad_rows(y2d, row_tile)
    rows_p = xp.shape[0]
    seed_arr = jnp.asarray([seed], dtype=jnp.int32)
    # NOTE: x could be aliased to the output (input_output_aliases) for an in-place
    # residual; kept un-aliased here for maximum portability.
    out = pl.pallas_call(
        functools.partial(_resadd_dropout_kernel, rate=rate, row_tile=row_tile),
        out_shape=jax.ShapeDtypeStruct((rows_p, d), x2d.dtype),
        grid_spec=pltpu.PrefetchScalarGridSpec(
            num_scalar_prefetch=1,          # seed lands in SMEM
            grid=(rows_p // row_tile,),
            in_specs=[
                pl.BlockSpec((row_tile, d), lambda i, seed: (i, 0)),
                pl.BlockSpec((row_tile, d), lambda i, seed: (i, 0)),
            ],
            out_specs=pl.BlockSpec((row_tile, d), lambda i, seed: (i, 0)),
        ),
        compiler_params=pltpu.CompilerParams(
            dimension_semantics=("parallel",),
            vmem_limit_bytes=_VMEM_LIMIT_BYTES),
    )(seed_arr, xp, yp)
    return out[:rows] if rows_p != rows else out


# ------------------------------ module wrapper ------------------------------ #
class SublayerConnection:
    """JAX/Pallas port of the PyTorch SublayerConnection (pre-RMSNorm residual block)."""

    def __init__(self, size: int, dropout: float, eps: float = 1e-6):
        self.size = size
        self.rate = float(dropout)
        self.eps = eps
        # RMSNorm weight initialized to ones, like nn.Parameter(torch.ones(dim)).
        self.norm_weight = jnp.ones((size,), dtype=jnp.float32)

    def __call__(self, x, sublayer, *, seed: int = 0, training: bool = True,
                 row_tile: int = None):
        b, s, d = x.shape
        assert d == self.size
        # For best store bandwidth D should be a multiple of 128 (lane-dense); smaller D
        # still works but takes masked partial stores.
        x2d = x.reshape(b * s, d)

        # 1) RMSNorm (Pallas)
        h2d = rmsnorm(x2d, self.norm_weight, eps=self.eps, row_tile=row_tile)

        # 2) arbitrary sublayer callable (plain JAX glue, as in the torch API)
        y = sublayer(h2d.reshape(b, s, d))
        y2d = y.reshape(b * s, d)

        # 3) residual + inverted dropout (Pallas)
        rate = self.rate if training else 0.0
        out2d = residual_dropout_add(x2d, y2d, seed, rate=rate, row_tile=row_tile)
        return out2d.reshape(b, s, d)


# ---------------------------------- demo ------------------------------------ #
if __name__ == "__main__":
    B, S, D = 2, 8, 32
    key = jax.random.PRNGKey(0)
    kx, kw = jax.random.split(key)

    x = jax.random.normal(kx, (B, S, D), dtype=jnp.float32)

    # Deterministic "sublayer": a small linear layer.
    W = 0.02 * jax.random.normal(kw, (D, D), dtype=jnp.float32)
    sublayer = lambda h: jnp.dot(h, W)

    module = SublayerConnection(size=D, dropout=0.1)

    # eval-mode numerical check against a pure-JAX reference (dropout disabled)
    out_eval = module(x, sublayer, seed=0, training=False)
    jax.block_until_ready(out_eval)
    ref_norm = x / jnp.sqrt(jnp.mean(x * x, axis=-1, keepdims=True) + 1e-6)
    ref = x + jnp.dot(ref_norm, W)
    assert out_eval.shape == (B, S, D) and out_eval.dtype == jnp.float32
    assert jnp.allclose(out_eval, ref, atol=1e-5, rtol=1e-5), "mismatch vs reference"

    # training-mode run (dropout active)
    out = module(x, sublayer, seed=1234, training=True)
    jax.block_until_ready(out)
    assert out.shape == (B, S, D) and out.dtype == jnp.float32

    print("KERNEL_OK")
</pallas_src>

<mosaic_0001>
module attributes {stable_mosaic.version = 11 : i64} {
  func.func @_rmsnorm_kernel(%arg0: i32, %arg1: memref<16x32xf32, #tpu.memory_space<vmem>>, %arg2: memref<1x32xf32, #tpu.memory_space<vmem>>, %arg3: memref<16x32xf32, #tpu.memory_space<vmem>>) attributes {dimension_semantics = [#tpu.dimension_semantics<parallel>], iteration_bounds = array<i64: 1>, scalar_prefetch = 0 : i64, scratch_operands = 0 : i64, tpu.core_type = #tpu.core_type<tc>, window_params = [{transform_indices = @transform_0, window_bounds = array<i64: 16, 32>}, {pipeline_mode = #tpu.pipeline_mode<synchronous>, transform_indices = @transform_1, window_bounds = array<i64: 1, 32>}, {transform_indices = @transform_2, window_bounds = array<i64: 16, 32>}]} {
    %c0 = arith.constant 0 : index
    %c0_0 = arith.constant 0 : index
    %0 = vector.load %arg1[%c0, %c0_0] : memref<16x32xf32, #tpu.memory_space<vmem>>, vector<16x32xf32>
    %1 = arith.mulf %0, %0 : vector<16x32xf32>
    %cst = arith.constant dense<0.000000e+00> : vector<16xf32>
    %2 = vector.multi_reduction <add>, %1, %cst [1] : vector<16x32xf32> to vector<16xf32>
    %3 = vector.shape_cast %2 : vector<16xf32> to vector<16x1xf32>
    %cst_1 = arith.constant 3.200000e+01 : f32
    %4 = vector.broadcast %cst_1 : f32 to vector<16x1xf32>
    %5 = arith.divf %3, %4 : vector<16x1xf32>
    %cst_2 = arith.constant 9.99999997E-7 : f32
    %6 = vector.broadcast %cst_2 : f32 to vector<16x1xf32>
    %7 = arith.addf %5, %6 : vector<16x1xf32>
    %8 = math.rsqrt %7 : vector<16x1xf32>
    %9 = vector.broadcast %8 : vector<16x1xf32> to vector<16x32xf32>
    %10 = arith.mulf %0, %9 : vector<16x32xf32>
    %c0_3 = arith.constant 0 : index
    %c0_4 = arith.constant 0 : index
    %11 = vector.load %arg2[%c0_3, %c0_4] : memref<1x32xf32, #tpu.memory_space<vmem>>, vector<1x32xf32>
    %12 = vector.broadcast %11 : vector<1x32xf32> to vector<16x32xf32>
    %13 = arith.mulf %10, %12 : vector<16x32xf32>
    %c0_5 = arith.constant 0 : index
    %c0_6 = arith.constant 0 : index
    %14 = vector.load %arg3[%c0_5, %c0_6] : memref<16x32xf32, #tpu.memory_space<vmem>>, vector<16x32xf32>
    tpu.vector_store %arg3[%c0_5, %c0_6], %13 {strides = array<i32>} : memref<16x32xf32, #tpu.memory_space<vmem>>, vector<16x32xf32>,
    return
  }
  func.func @transform_0(%arg0: i32) -> (i32, i32) {
    %c0_i32 = arith.constant 0 : i32
    %c0_i32_0 = arith.constant 0 : i32
    return %arg0, %c0_i32 : i32, i32
  }
  func.func @transform_1(%arg0: i32) -> (i32, i32) {
    %c0_i32 = arith.constant 0 : i32
    %c0_i32_0 = arith.constant 0 : i32
    %c0_i32_1 = arith.constant 0 : i32
    return %c0_i32, %c0_i32_0 : i32, i32
  }
  func.func @transform_2(%arg0: i32) -> (i32, i32) {
    %c0_i32 = arith.constant 0 : i32
    %c0_i32_0 = arith.constant 0 : i32
    return %arg0, %c0_i32 : i32, i32
  }
}

</mosaic_0001>

<llo_original>
// kernel: tpu_custom_call.1
$region0: #{tpu_custom_call.1}
  #allocation0 [shape = 'u32[]', space=smem, size = 0x4, offset = 0x4, fixed_abs, tag = 'smem constant byte address 0x4 - core index']
  #allocation1 [shape = 'u32[144,128]{1,0:T(1,128)}', space=vmem, size = 0x12000, scoped, tag = 'internal scratch']
  %s0 = inlined_call_operand.hbm [shape: f32[16,32], index: 0, kind: input, shape index: {}]
  %s1 = inlined_call_operand.vmem [shape: f32[1,32], index: 1, kind: input, shape index: {}]
  %s2 = inlined_call_operand.hbm [shape: f32[16,32], index: 2, kind: output, shape index: {}]
  %s3 = sld [smem:[#allocation0]]
  $region22: #{tpu_custom_call.1} parent=0
    _
  %s5 = ssub.s32 1, %s3
  %s6 = scalar_select 0, %s5, %s3
  $region1: #{tpu_custom_call.1} parent=0
    #allocation2 [shape = 'u8[8192]{0}', space=vmem, size = 0x2000, scoped, tag = 'input window, operand 0, single buffered']
    #allocation3 [shape = 's32[1]{0}', space=sflag, size = 0x4, scoped, tag = 'scoped memory for tpu_custom_call.1']
    #allocation4 [shape = 's32[1]{0}', space=sflag, size = 0x4, scoped, tag = 'scoped memory for tpu_custom_call.1']
    #allocation5 [shape = 'u8[8192]{0}', space=vmem, size = 0x2000, scoped, tag = 'output window, operand 0, single buffered']
    %7 = vsyncpa [#allocation3], 0
    %8 = vsyncpa [#allocation4], 0
    // Predicated region
    $region2: #{tpu_custom_call.1} parent=1 // pred_check
      _
    $region3: #{tpu_custom_call.1} parent=1 // pred_check_branch
      %10 = sbr.rel (0) target = $region5
    $region4: #{tpu_custom_call.1} parent=1 // pred_region
      %s12 = ssub.s32 256, 256
      %13 = vsyncadd [#allocation3], %s12
      %s14 = sshll.u32 [#allocation2], 4
      %s15 = int_to_ptr.vmem [resolvable:$true] %s14
      %20 = dma.hbm_to_vmem [thread:$0]  %s0, 256, %s15, [#allocation3], 128, 128, 8
    $region5: #{tpu_custom_call.1} parent=1 // pred_fallthru
      _
    // Predicated region
    $region6: #{tpu_custom_call.1} parent=1 // pred_check
      _
    $region7: #{tpu_custom_call.1} parent=1 // pred_check_branch
      %22 = sbr.rel (0) target = $region9
    $region8: #{tpu_custom_call.1} parent=1 // pred_region
      _
    $region9: #{tpu_custom_call.1} parent=1 // pred_fallthru
      _
    // Predicated region
    $region10: #{tpu_custom_call.1} parent=1 // pred_check
      _
    $region11: #{tpu_custom_call.1} parent=1 // pred_check_branch
      %24 = sbr.rel (0) target = $region13
    $region12: #{tpu_custom_call.1} parent=1 // pred_region
      %25 = dma.done [#allocation3], 256
    $region13: #{tpu_custom_call.1} parent=1 // pred_fallthru
      _
    %v26 = vld [vmem:[#allocation2] sm:$0xff]
    %v27 = vld [vmem:[#allocation2 + $0x8] sm:$0xff]
    %v28 = vmul.f32 %v26, %v26
    %v29 = vmul.f32 %v27, %v27
    %vm30 = vcmask 261120
    %v31 = vsel %vm30, %v28, 0.0
    %32 = vadd.xlane.f32.xlu0 %v31
    %v33 = vpop.xlane.xlu0 %32
    %v34 = vsel %vm30, %v29, 0.0
    %35 = vadd.xlane.f32.xlu0 %v34
    %v36 = vpop.xlane.xlu0 %35
    %v37 = vrcp.pop 32.0
    %v38 = vmul.f32 %v33, %v37
    %v39 = vmul.f32 %v36, %v37
    %v40 = vadd.f32 %v38, 1e-06
    %v41 = vadd.f32 %v39, 1e-06
    %v42 = vrsqrt.pop %v40
    %v43 = vrsqrt.pop %v41
    %v44 = vmul.f32 %v26, %v42
    %v45 = vmul.f32 %v27, %v43
    %v46 = vld [vmem:[%s1] sm:$0x1]
    %v48 = vlaneseq
    %v49 = vshrl.u32 %v48, 7
    %v50 = vsub.s32 0, %v49
    %v51 = vrot.slane %v46, %v50
    %v53 = vmul.f32 %v44, %v51
    %v54 = vmul.f32 %v45, %v51
    %55 = vst.msk [vmem:[#allocation5] sm:$0xff] %vm30, %v53
    %56 = vst.msk [vmem:[#allocation5 + $0x8] sm:$0xff] %vm30, %v54
    // Predicated region
    $region14: #{tpu_custom_call.1} parent=1 // pred_check
      _
    $region15: #{tpu_custom_call.1} parent=1 // pred_check_branch
      %58 = sbr.rel (0) target = $region17
    $region16: #{tpu_custom_call.1} parent=1 // pred_region
      %s60 = ssub.s32 256, 256
      %61 = vsyncadd [#allocation4], %s60
      %s62 = sshll.u32 [#allocation5], 4
      %s63 = int_to_ptr.vmem [resolvable:$true] %s62
      %68 = dma.vmem_to_hbm [thread:$0]  %s63, 256, %s2, [#allocation4], 128, 128, 8
    $region17: #{tpu_custom_call.1} parent=1 // pred_fallthru
      _
    // Predicated region
    $region18: #{tpu_custom_call.1} parent=1 // pred_check
      _
    $region19: #{tpu_custom_call.1} parent=1 // pred_check_branch
      %70 = sbr.rel (0) target = $region21
    $region20: #{tpu_custom_call.1} parent=1 // pred_region
      %71 = dma.done [#allocation4], 256
    $region21: #{tpu_custom_call.1} parent=1 // pred_fallthru
      _
    %72 = vsyncpa [#allocation3], 1
    %73 = vsyncpa [#allocation4], 1

</llo_original>
